<compile_context>
chip_gen: v6e
topology: v6e:2x2x1
jax: 0.10.0
libtpu: 0.0.40
codegen_flags: <defaults>
</compile_context>

<pallas_src>
import functools

import jax
import jax.numpy as jnp
from jax.experimental import pallas as pl
from jax.experimental.pallas import tpu as pltpu


def _round_up(n, m):
    return ((n + m - 1) // m) * m


def _pad2(a, rows, cols):
    r, c = a.shape
    if r == rows and c == cols:
        return a
    return jnp.pad(a, ((0, rows - r), (0, cols - c)))


def _mlp_kernel(n_layers, x_ref, *refs):
    """Fused MLP kernel.

    refs = (w0, b0, w1, b1, ..., w_{L-1}, b_{L-1}, out_ref)
      layer 0            : initial projection   (no relu)
      layers 1..L-2      : hidden layers        (relu)
      layer L-1          : final projection     (no relu)
    Weights arrive in the compute dtype (bf16 by default); biases in f32.
    """
    out_ref = refs[-1]
    params = refs[:-1]

    h = x_ref[...]                                   # compute dtype (e.g. bf16)
    for i in range(n_layers):
        w = params[2 * i][...]
        b = params[2 * i + 1][...]                   # (1, out) f32, broadcasts over rows
        acc = jnp.dot(h, w, preferred_element_type=jnp.float32) + b   # f32 accumulator
        if 0 < i < n_layers - 1:                     # relu only on the hidden layers (f32 VPU)
            acc = jnp.maximum(acc, 0.0)
        h = acc if i == n_layers - 1 else acc.astype(w.dtype)         # back to MXU dtype
    out_ref[...] = h.astype(out_ref.dtype)           # lane-dense (>=128-lane) store


def no_skip_supervenient_forward(x, params, *, feature_size, block_b=512,
                                 compute_dtype=jnp.bfloat16):
    """x: (B, num_atoms); params: list of (W (in,out), b (1,out)) per layer, f32.

    Returns (B, feature_size) float32. Handles ragged batch sizes and arbitrary
    feature dims by zero-padding to (8, 128)-aligned shapes and stripping after.
    """
    B, num_atoms = x.shape
    n_layers = len(params)

    # ---- pad feature dims to the 128-lane width, batch to the batch tile ----
    a_pad = _round_up(num_atoms, 128)
    f_pad = _round_up(feature_size, 128)

    b8 = _round_up(B, 8)
    block_b = _round_up(max(8, min(block_b, b8)), 8)   # clamp tile to (padded) batch
    b_pad = _round_up(B, block_b)                      # grid may still have >=2 steps
    grid = (b_pad // block_b,)

    x_pad = _pad2(x, b_pad, a_pad).astype(compute_dtype)

    flat_params = []
    in_specs = [pl.BlockSpec((block_b, a_pad), lambda i: (i, 0))]      # x tile
    flops = 0
    param_bytes = 0
    for (w, b) in params:
        fan_in, fan_out = w.shape
        ip = _round_up(fan_in, 128)
        op = _round_up(fan_out, 128)
        w_p = _pad2(w, ip, op).astype(compute_dtype)                   # zero-padded weights
        b_p = _pad2(jnp.reshape(b, (1, -1)), 1, op).astype(jnp.float32)
        flat_params += [w_p, b_p]
        # Constant index_map -> fetched once, resident across all grid steps.
        in_specs.append(pl.BlockSpec((ip, op), lambda i: (0, 0)))
        in_specs.append(pl.BlockSpec((1, op), lambda i: (0, 0)))
        flops += 2 * b_pad * ip * op
        param_bytes += w_p.size * w_p.dtype.itemsize + b_p.size * 4

    out_spec = pl.BlockSpec((block_b, f_pad), lambda i: (i, 0))        # lane-dense output
    out_shape = jax.ShapeDtypeStruct((b_pad, f_pad), jnp.float32)

    # VMEM budget: double-buffered x/out tiles + (conservatively double-buffered)
    # resident params + margin.  Capped well below v7x's 64 MiB physical VMEM.
    x_item = jnp.dtype(compute_dtype).itemsize
    tile_bytes = 2 * (block_b * a_pad * x_item + block_b * f_pad * 4)
    vmem_limit = int(min(max(tile_bytes + 2 * param_bytes + (4 << 20), 32 << 20), 48 << 20))

    cost = pl.CostEstimate(
        flops=flops,
        transcendentals=0,
        bytes_accessed=int(x_pad.size * x_item + param_bytes + b_pad * f_pad * 4),
    )

    out = pl.pallas_call(
        functools.partial(_mlp_kernel, n_layers),
        out_shape=out_shape,
        grid_spec=pltpu.PrefetchScalarGridSpec(
            num_scalar_prefetch=0,
            grid=grid,
            in_specs=in_specs,
            out_specs=out_spec,
        ),
        compiler_params=pltpu.CompilerParams(
            dimension_semantics=("parallel",),     # batch steps shard across TCs (v7x)
            vmem_limit_bytes=vmem_limit,
        ),
        cost_estimate=cost,
    )(x_pad, *flat_params)

    return out[:B, :feature_size]


def init_params(key, num_atoms, feature_size, hidden_sizes, include_bias=True):
    """Deterministic init mirroring the module's layer shapes (weights as (in, out))."""
    sizes = [(num_atoms, hidden_sizes[0])]                 # initial_projection
    in_size = hidden_sizes[0]
    for h in hidden_sizes:                                 # hidden_layers
        sizes.append((in_size, h))
        in_size = h
    sizes.append((in_size, feature_size))                  # final_projection

    params = []
    for (fan_in, fan_out) in sizes:
        key, kw, kb = jax.random.split(key, 3)
        bound = 1.0 / jnp.sqrt(jnp.float32(fan_in))        # PyTorch nn.Linear default
        w = jax.random.uniform(kw, (fan_in, fan_out), jnp.float32, -bound, bound)
        if include_bias:
            b = jax.random.uniform(kb, (1, fan_out), jnp.float32, -bound, bound)
        else:
            b = jnp.zeros((1, fan_out), jnp.float32)
        params.append((w, b))
    return params


def _reference_forward(x, params, compute_dtype=jnp.bfloat16):
    """Pure-JAX forward mirroring the kernel numerics (bf16 MXU, f32 accumulate)."""
    h = x.astype(compute_dtype)
    n = len(params)
    for i, (w, b) in enumerate(params):
        acc = jnp.dot(h, w.astype(compute_dtype),
                      preferred_element_type=jnp.float32) + b.astype(jnp.float32)
        if 0 < i < n - 1:
            acc = jnp.maximum(acc, 0.0)
        h = acc if i == n - 1 else acc.astype(compute_dtype)
    return h


if __name__ == "__main__":
    num_atoms = 4
    feature_size = 2
    hidden_sizes = [32, 32]

    key = jax.random.PRNGKey(0)
    key, kx = jax.random.split(key)
    params = init_params(key, num_atoms, feature_size, hidden_sizes, include_bias=True)

    # 1) Small, ragged batch: exercises batch + feature padding (single grid step).
    x_small = jax.random.normal(kx, (50, num_atoms), jnp.float32)
    out_small = jax.block_until_ready(
        no_skip_supervenient_forward(x_small, params, feature_size=feature_size))
    assert out_small.shape == (50, feature_size)
    assert jnp.allclose(out_small, _reference_forward(x_small, params),
                        atol=1e-4, rtol=1e-4)

    # 2) Larger batch with explicit tile -> multi-step grid (checks tiling/index maps).
    key, kx2 = jax.random.split(key)
    x_big = jax.random.normal(kx2, (1024, num_atoms), jnp.float32)
    out_big = jax.block_until_ready(
        no_skip_supervenient_forward(x_big, params, feature_size=feature_size,
                                     block_b=256))
    assert out_big.shape == (1024, feature_size)
    assert jnp.allclose(out_big, _reference_forward(x_big, params),
                        atol=1e-4, rtol=1e-4)

    print("KERNEL_OK")
</pallas_src>

<mosaic_0001>
module attributes {stable_mosaic.version = 11 : i64} {
  func.func @_mlp_kernel(%arg0: i32, %arg1: memref<56x128xbf16, #tpu.memory_space<vmem>>, %arg2: memref<128x128xbf16, #tpu.memory_space<vmem>>, %arg3: memref<1x128xf32, #tpu.memory_space<vmem>>, %arg4: memref<128x128xbf16, #tpu.memory_space<vmem>>, %arg5: memref<1x128xf32, #tpu.memory_space<vmem>>, %arg6: memref<128x128xbf16, #tpu.memory_space<vmem>>, %arg7: memref<1x128xf32, #tpu.memory_space<vmem>>, %arg8: memref<128x128xbf16, #tpu.memory_space<vmem>>, %arg9: memref<1x128xf32, #tpu.memory_space<vmem>>, %arg10: memref<56x128xf32, #tpu.memory_space<vmem>>) attributes {dimension_semantics = [#tpu.dimension_semantics<parallel>], iteration_bounds = array<i64: 1>, scalar_prefetch = 0 : i64, scratch_operands = 0 : i64, tpu.core_type = #tpu.core_type<tc>, window_params = [{transform_indices = @transform_0, window_bounds = array<i64: 56, 128>}, {pipeline_mode = #tpu.pipeline_mode<synchronous>, transform_indices = @transform_1, window_bounds = array<i64: 128, 128>}, {pipeline_mode = #tpu.pipeline_mode<synchronous>, transform_indices = @transform_2, window_bounds = array<i64: 1, 128>}, {pipeline_mode = #tpu.pipeline_mode<synchronous>, transform_indices = @transform_3, window_bounds = array<i64: 128, 128>}, {pipeline_mode = #tpu.pipeline_mode<synchronous>, transform_indices = @transform_4, window_bounds = array<i64: 1, 128>}, {pipeline_mode = #tpu.pipeline_mode<synchronous>, transform_indices = @transform_5, window_bounds = array<i64: 128, 128>}, {pipeline_mode = #tpu.pipeline_mode<synchronous>, transform_indices = @transform_6, window_bounds = array<i64: 1, 128>}, {pipeline_mode = #tpu.pipeline_mode<synchronous>, transform_indices = @transform_7, window_bounds = array<i64: 128, 128>}, {pipeline_mode = #tpu.pipeline_mode<synchronous>, transform_indices = @transform_8, window_bounds = array<i64: 1, 128>}, {transform_indices = @transform_9, window_bounds = array<i64: 56, 128>}]} {
    %c0 = arith.constant 0 : index
    %c0_0 = arith.constant 0 : index
    %0 = vector.load %arg1[%c0, %c0_0] : memref<56x128xbf16, #tpu.memory_space<vmem>>, vector<56x128xbf16>
    %c0_1 = arith.constant 0 : index
    %c0_2 = arith.constant 0 : index
    %1 = vector.load %arg2[%c0_1, %c0_2] : memref<128x128xbf16, #tpu.memory_space<vmem>>, vector<128x128xbf16>
    %c0_3 = arith.constant 0 : index
    %c0_4 = arith.constant 0 : index
    %2 = vector.load %arg3[%c0_3, %c0_4] : memref<1x128xf32, #tpu.memory_space<vmem>>, vector<1x128xf32>
    %cst = arith.constant dense<0.000000e+00> : vector<56x128xf32>
    %3 = tpu.matmul %0, %1, %cst {dimension_numbers = #tpu.dot_dimension_numbers<[1], [0], [0], [1], [0, 0, 1, 1], [], []>} : vector<56x128xbf16>, vector<128x128xbf16>, vector<56x128xf32> -> vector<56x128xf32>
    %4 = vector.broadcast %2 : vector<1x128xf32> to vector<56x128xf32>
    %5 = arith.addf %3, %4 : vector<56x128xf32>
    %6 = arith.truncf %5 : vector<56x128xf32> to vector<56x128xbf16>
    %c0_5 = arith.constant 0 : index
    %c0_6 = arith.constant 0 : index
    %7 = vector.load %arg4[%c0_5, %c0_6] : memref<128x128xbf16, #tpu.memory_space<vmem>>, vector<128x128xbf16>
    %c0_7 = arith.constant 0 : index
    %c0_8 = arith.constant 0 : index
    %8 = vector.load %arg5[%c0_7, %c0_8] : memref<1x128xf32, #tpu.memory_space<vmem>>, vector<1x128xf32>
    %cst_9 = arith.constant dense<0.000000e+00> : vector<56x128xf32>
    %9 = tpu.matmul %6, %7, %cst_9 {dimension_numbers = #tpu.dot_dimension_numbers<[1], [0], [0], [1], [0, 0, 1, 1], [], []>} : vector<56x128xbf16>, vector<128x128xbf16>, vector<56x128xf32> -> vector<56x128xf32>
    %10 = vector.broadcast %8 : vector<1x128xf32> to vector<56x128xf32>
    %11 = arith.addf %9, %10 : vector<56x128xf32>
    %cst_10 = arith.constant 0.000000e+00 : f32
    %12 = vector.broadcast %cst_10 : f32 to vector<56x128xf32>
    %13 = arith.maximumf %11, %12 : vector<56x128xf32>
    %14 = arith.truncf %13 : vector<56x128xf32> to vector<56x128xbf16>
    %c0_11 = arith.constant 0 : index
    %c0_12 = arith.constant 0 : index
    %15 = vector.load %arg6[%c0_11, %c0_12] : memref<128x128xbf16, #tpu.memory_space<vmem>>, vector<128x128xbf16>
    %c0_13 = arith.constant 0 : index
    %c0_14 = arith.constant 0 : index
    %16 = vector.load %arg7[%c0_13, %c0_14] : memref<1x128xf32, #tpu.memory_space<vmem>>, vector<1x128xf32>
    %cst_15 = arith.constant dense<0.000000e+00> : vector<56x128xf32>
    %17 = tpu.matmul %14, %15, %cst_15 {dimension_numbers = #tpu.dot_dimension_numbers<[1], [0], [0], [1], [0, 0, 1, 1], [], []>} : vector<56x128xbf16>, vector<128x128xbf16>, vector<56x128xf32> -> vector<56x128xf32>
    %18 = vector.broadcast %16 : vector<1x128xf32> to vector<56x128xf32>
    %19 = arith.addf %17, %18 : vector<56x128xf32>
    %cst_16 = arith.constant 0.000000e+00 : f32
    %20 = vector.broadcast %cst_16 : f32 to vector<56x128xf32>
    %21 = arith.maximumf %19, %20 : vector<56x128xf32>
    %22 = arith.truncf %21 : vector<56x128xf32> to vector<56x128xbf16>
    %c0_17 = arith.constant 0 : index
    %c0_18 = arith.constant 0 : index
    %23 = vector.load %arg8[%c0_17, %c0_18] : memref<128x128xbf16, #tpu.memory_space<vmem>>, vector<128x128xbf16>
    %c0_19 = arith.constant 0 : index
    %c0_20 = arith.constant 0 : index
    %24 = vector.load %arg9[%c0_19, %c0_20] : memref<1x128xf32, #tpu.memory_space<vmem>>, vector<1x128xf32>
    %cst_21 = arith.constant dense<0.000000e+00> : vector<56x128xf32>
    %25 = tpu.matmul %22, %23, %cst_21 {dimension_numbers = #tpu.dot_dimension_numbers<[1], [0], [0], [1], [0, 0, 1, 1], [], []>} : vector<56x128xbf16>, vector<128x128xbf16>, vector<56x128xf32> -> vector<56x128xf32>
    %26 = vector.broadcast %24 : vector<1x128xf32> to vector<56x128xf32>
    %27 = arith.addf %25, %26 : vector<56x128xf32>
    %c0_22 = arith.constant 0 : index
    %c0_23 = arith.constant 0 : index
    %28 = vector.load %arg10[%c0_22, %c0_23] : memref<56x128xf32, #tpu.memory_space<vmem>>, vector<56x128xf32>
    tpu.vector_store %arg10[%c0_22, %c0_23], %27 {strides = array<i32>} : memref<56x128xf32, #tpu.memory_space<vmem>>, vector<56x128xf32>,
    return
  }
  func.func @transform_0(%arg0: i32) -> (i32, i32) {
    %c0_i32 = arith.constant 0 : i32
    %c0_i32_0 = arith.constant 0 : i32
    return %arg0, %c0_i32 : i32, i32
  }
  func.func @transform_1(%arg0: i32) -> (i32, i32) {
    %c0_i32 = arith.constant 0 : i32
    %c0_i32_0 = arith.constant 0 : i32
    %c0_i32_1 = arith.constant 0 : i32
    return %c0_i32, %c0_i32_0 : i32, i32
  }
  func.func @transform_2(%arg0: i32) -> (i32, i32) {
    %c0_i32 = arith.constant 0 : i32
    %c0_i32_0 = arith.constant 0 : i32
    %c0_i32_1 = arith.constant 0 : i32
    return %c0_i32, %c0_i32_0 : i32, i32
  }
  func.func @transform_3(%arg0: i32) -> (i32, i32) {
    %c0_i32 = arith.constant 0 : i32
    %c0_i32_0 = arith.constant 0 : i32
    %c0_i32_1 = arith.constant 0 : i32
    return %c0_i32, %c0_i32_0 : i32, i32
  }
  func.func @transform_4(%arg0: i32) -> (i32, i32) {
    %c0_i32 = arith.constant 0 : i32
    %c0_i32_0 = arith.constant 0 : i32
    %c0_i32_1 = arith.constant 0 : i32
    return %c0_i32, %c0_i32_0 : i32, i32
  }
  func.func @transform_5(%arg0: i32) -> (i32, i32) {
    %c0_i32 = arith.constant 0 : i32
    %c0_i32_0 = arith.constant 0 : i32
    %c0_i32_1 = arith.constant 0 : i32
    return %c0_i32, %c0_i32_0 : i32, i32
  }
  func.func @transform_6(%arg0: i32) -> (i32, i32) {
    %c0_i32 = arith.constant 0 : i32
    %c0_i32_0 = arith.constant 0 : i32
    %c0_i32_1 = arith.constant 0 : i32
    return %c0_i32, %c0_i32_0 : i32, i32
  }
  func.func @transform_7(%arg0: i32) -> (i32, i32) {
    %c0_i32 = arith.constant 0 : i32
    %c0_i32_0 = arith.constant 0 : i32
    %c0_i32_1 = arith.constant 0 : i32
    return %c0_i32, %c0_i32_0 : i32, i32
  }
  func.func @transform_8(%arg0: i32) -> (i32, i32) {
    %c0_i32 = arith.constant 0 : i32
    %c0_i32_0 = arith.constant 0 : i32
    %c0_i32_1 = arith.constant 0 : i32
    return %c0_i32, %c0_i32_0 : i32, i32
  }
  func.func @transform_9(%arg0: i32) -> (i32, i32) {
    %c0_i32 = arith.constant 0 : i32
    %c0_i32_0 = arith.constant 0 : i32
    return %arg0, %c0_i32 : i32, i32
  }
}

</mosaic_0001>

<llo_original>
// kernel: tpu_custom_call.1
$region0: #{tpu_custom_call.1}
  #allocation0 [shape = 'u32[]', space=smem, size = 0x4, offset = 0x4, fixed_abs, tag = 'smem constant byte address 0x4 - core index']
  #allocation1 [shape = 'u32[144,128]{1,0:T(1,128)}', space=vmem, size = 0x12000, scoped, tag = 'internal scratch']
  %s0 = inlined_call_operand.hbm [shape: bf16[56,128], index: 0, kind: input, shape index: {}]
  %s1 = inlined_call_operand.hbm [shape: bf16[128,128], index: 1, kind: input, shape index: {}]
  %s2 = inlined_call_operand.vmem [shape: f32[1,128], index: 2, kind: input, shape index: {}]
  %s3 = inlined_call_operand.hbm [shape: bf16[128,128], index: 3, kind: input, shape index: {}]
  %s4 = inlined_call_operand.vmem [shape: f32[1,128], index: 4, kind: input, shape index: {}]
  %s5 = inlined_call_operand.hbm [shape: bf16[128,128], index: 5, kind: input, shape index: {}]
  %s6 = inlined_call_operand.vmem [shape: f32[1,128], index: 6, kind: input, shape index: {}]
  %s7 = inlined_call_operand.hbm [shape: bf16[128,128], index: 7, kind: input, shape index: {}]
  %s8 = inlined_call_operand.vmem [shape: f32[1,128], index: 8, kind: input, shape index: {}]
  %s9 = inlined_call_operand.hbm [shape: f32[56,128], index: 9, kind: output, shape index: {}]
  %s10 = sld [smem:[#allocation0]]
  $region66: #{tpu_custom_call.1} parent=0
    _
  %s12 = ssub.s32 1, %s10
  %s13 = scalar_select 0, %s12, %s10
  $region1: #{tpu_custom_call.1} parent=0
    #allocation2 [shape = 'u8[14336]{0}', space=vmem, size = 0x3800, scoped, tag = 'input window, operand 0, single buffered']
    #allocation3 [shape = 's32[1]{0}', space=sflag, size = 0x4, scoped, tag = 'scoped memory for tpu_custom_call.1']
    #allocation4 [shape = 's32[1]{0}', space=sflag, size = 0x4, scoped, tag = 'scoped memory for tpu_custom_call.1']
    #allocation5 [shape = 'u8[32768]{0}', space=vmem, size = 0x8000, scoped, tag = 'input window, operand 1, single buffered']
    #allocation6 [shape = 's32[1]{0}', space=sflag, size = 0x4, scoped, tag = 'scoped memory for tpu_custom_call.1']
    #allocation7 [shape = 'u8[32768]{0}', space=vmem, size = 0x8000, scoped, tag = 'input window, operand 3, single buffered']
    #allocation8 [shape = 'u8[32768]{0}', space=vmem, size = 0x8000, scoped, tag = 'input window, operand 5, single buffered']
    #allocation9 [shape = 's32[1]{0}', space=sflag, size = 0x4, scoped, tag = 'scoped memory for tpu_custom_call.1']
    #allocation10 [shape = 'u8[32768]{0}', space=vmem, size = 0x8000, scoped, tag = 'input window, operand 7, single buffered']
    #allocation11 [shape = 'u8[28672]{0}', space=vmem, size = 0x7000, scoped, tag = 'output window, operand 0, single buffered']
    %14 = vsyncpa [#allocation3], 0
    %15 = vsyncpa [#allocation6], 0
    %16 = vsyncpa [#allocation9], 0
    %17 = vsyncpa [#allocation4], 0
    // Predicated region
    $region2: #{tpu_custom_call.1} parent=1 // pred_check
      _
    $region3: #{tpu_custom_call.1} parent=1 // pred_check_branch
      %19 = sbr.rel (0) target = $region5
    $region4: #{tpu_custom_call.1} parent=1 // pred_region
      %s21 = ssub.s32 448, 448
      %22 = vsyncadd [#allocation3], %s21
      %s23 = sshll.u32 [#allocation2], 4
      %s24 = int_to_ptr.vmem [resolvable:$true] %s23
      %29 = dma.hbm_to_vmem [thread:$0]  %s0, 448, %s24, [#allocation3], 64, 64, 4
    $region5: #{tpu_custom_call.1} parent=1 // pred_fallthru
      _
    // Predicated region
    $region6: #{tpu_custom_call.1} parent=1 // pred_check
      _
    $region7: #{tpu_custom_call.1} parent=1 // pred_check_branch
      %31 = sbr.rel (0) target = $region9
    $region8: #{tpu_custom_call.1} parent=1 // pred_region
      %s33 = ssub.s32 1024, 1024
      %34 = vsyncadd [#allocation6], %s33
      %s35 = sshll.u32 [#allocation5], 4
      %s36 = int_to_ptr.vmem [resolvable:$true] %s35
      %41 = dma.hbm_to_vmem [thread:$0]  %s1, 1024, %s36, [#allocation6], 64, 64, 4
    $region9: #{tpu_custom_call.1} parent=1 // pred_fallthru
      _
    // Predicated region
    $region10: #{tpu_custom_call.1} parent=1 // pred_check
      _
    $region11: #{tpu_custom_call.1} parent=1 // pred_check_branch
      %43 = sbr.rel (0) target = $region13
    $region12: #{tpu_custom_call.1} parent=1 // pred_region
      _
    $region13: #{tpu_custom_call.1} parent=1 // pred_fallthru
      _
    // Predicated region
    $region14: #{tpu_custom_call.1} parent=1 // pred_check
      _
    $region15: #{tpu_custom_call.1} parent=1 // pred_check_branch
      %45 = sbr.rel (0) target = $region17
    $region16: #{tpu_custom_call.1} parent=1 // pred_region
      %s47 = ssub.s32 1024, 1024
      %48 = vsyncadd [#allocation6], %s47
      %s49 = sshll.u32 [#allocation7], 4
      %s50 = int_to_ptr.vmem [resolvable:$true] %s49
      %55 = dma.hbm_to_vmem [thread:$0]  %s3, 1024, %s50, [#allocation6], 64, 64, 4
    $region17: #{tpu_custom_call.1} parent=1 // pred_fallthru
      _
    // Predicated region
    $region18: #{tpu_custom_call.1} parent=1 // pred_check
      _
    $region19: #{tpu_custom_call.1} parent=1 // pred_check_branch
      %57 = sbr.rel (0) target = $region21
    $region20: #{tpu_custom_call.1} parent=1 // pred_region
      _
    $region21: #{tpu_custom_call.1} parent=1 // pred_fallthru
      _
    // Predicated region
    $region22: #{tpu_custom_call.1} parent=1 // pred_check
      _
    $region23: #{tpu_custom_call.1} parent=1 // pred_check_branch
      %59 = sbr.rel (0) target = $region25
    $region24: #{tpu_custom_call.1} parent=1 // pred_region
      %s61 = ssub.s32 1024, 1024
      %62 = vsyncadd [#allocation9], %s61
      %s63 = sshll.u32 [#allocation8], 4
      %s64 = int_to_ptr.vmem [resolvable:$true] %s63
      %69 = dma.hbm_to_vmem [thread:$0]  %s5, 1024, %s64, [#allocation9], 64, 64, 4
    $region25: #{tpu_custom_call.1} parent=1 // pred_fallthru
      _
    // Predicated region
    $region26: #{tpu_custom_call.1} parent=1 // pred_check
      _
    $region27: #{tpu_custom_call.1} parent=1 // pred_check_branch
      %71 = sbr.rel (0) target = $region29
    $region28: #{tpu_custom_call.1} parent=1 // pred_region
      _
    $region29: #{tpu_custom_call.1} parent=1 // pred_fallthru
      _
    // Predicated region
    $region30: #{tpu_custom_call.1} parent=1 // pred_check
      _
    $region31: #{tpu_custom_call.1} parent=1 // pred_check_branch
      %73 = sbr.rel (0) target = $region33
    $region32: #{tpu_custom_call.1} parent=1 // pred_region
      %s75 = ssub.s32 1024, 1024
      %76 = vsyncadd [#allocation9], %s75
      %s77 = sshll.u32 [#allocation10], 4
      %s78 = int_to_ptr.vmem [resolvable:$true] %s77
      %83 = dma.hbm_to_vmem [thread:$0]  %s7, 1024, %s78, [#allocation9], 64, 64, 4
    $region33: #{tpu_custom_call.1} parent=1 // pred_fallthru
      _
    // Predicated region
    $region34: #{tpu_custom_call.1} parent=1 // pred_check
      _
    $region35: #{tpu_custom_call.1} parent=1 // pred_check_branch
      %85 = sbr.rel (0) target = $region37
    $region36: #{tpu_custom_call.1} parent=1 // pred_region
      _
    $region37: #{tpu_custom_call.1} parent=1 // pred_fallthru
      _
    // Predicated region
    $region38: #{tpu_custom_call.1} parent=1 // pred_check
      _
    $region39: #{tpu_custom_call.1} parent=1 // pred_check_branch
      %87 = sbr.rel (0) target = $region41
    $region40: #{tpu_custom_call.1} parent=1 // pred_region
      %88 = dma.done [#allocation3], 448
    $region41: #{tpu_custom_call.1} parent=1 // pred_fallthru
      _
    // Predicated region
    $region42: #{tpu_custom_call.1} parent=1 // pred_check
      _
    $region43: #{tpu_custom_call.1} parent=1 // pred_check_branch
      %90 = sbr.rel (0) target = $region45
    $region44: #{tpu_custom_call.1} parent=1 // pred_region
      %91 = dma.done [#allocation6], 1024
    $region45: #{tpu_custom_call.1} parent=1 // pred_fallthru
      _
    // Predicated region
    $region46: #{tpu_custom_call.1} parent=1 // pred_check
      _
    $region47: #{tpu_custom_call.1} parent=1 // pred_check_branch
      %93 = sbr.rel (0) target = $region49
    $region48: #{tpu_custom_call.1} parent=1 // pred_region
      %94 = dma.done [#allocation6], 1024
    $region49: #{tpu_custom_call.1} parent=1 // pred_fallthru
      _
    // Predicated region
    $region50: #{tpu_custom_call.1} parent=1 // pred_check
      _
    $region51: #{tpu_custom_call.1} parent=1 // pred_check_branch
      %96 = sbr.rel (0) target = $region53
    $region52: #{tpu_custom_call.1} parent=1 // pred_region
      %97 = dma.done [#allocation9], 1024
    $region53: #{tpu_custom_call.1} parent=1 // pred_fallthru
      _
    // Predicated region
    $region54: #{tpu_custom_call.1} parent=1 // pred_check
      _
    $region55: #{tpu_custom_call.1} parent=1 // pred_check_branch
      %99 = sbr.rel (0) target = $region57
    $region56: #{tpu_custom_call.1} parent=1 // pred_region
      %100 = dma.done [#allocation9], 1024
    $region57: #{tpu_custom_call.1} parent=1 // pred_fallthru
      _
    %v102 = vld [vmem:[#allocation2] sm:$0xf]
    %v103 = vld [vmem:[#allocation2 + $0x4] sm:$0xf]
    %v104 = vld [vmem:[#allocation2 + $0x8] sm:$0xf]
    %v105 = vld [vmem:[#allocation2 + $0xc] sm:$0xf]
    %v106 = vld [vmem:[#allocation2 + $0x10] sm:$0xf]
    %v107 = vld [vmem:[#allocation2 + $0x14] sm:$0xf]
    %v108 = vld [vmem:[#allocation2 + $0x18] sm:$0xf]
    %v109 = vld [vmem:[#allocation5] sm:$0xf]
    %v110 = vld [vmem:[#allocation5 + $0x4] sm:$0xf]
    %v111 = vld [vmem:[#allocation5 + $0x8] sm:$0xf]
    %v112 = vld [vmem:[#allocation5 + $0xc] sm:$0xf]
    %v113 = vld [vmem:[#allocation5 + $0x10] sm:$0xf]
    %v114 = vld [vmem:[#allocation5 + $0x14] sm:$0xf]
    %v115 = vld [vmem:[#allocation5 + $0x18] sm:$0xf]
    %v116 = vld [vmem:[#allocation5 + $0x1c] sm:$0xf]
    %v117 = vld [vmem:[#allocation5 + $0x20] sm:$0xf]
    %v118 = vld [vmem:[#allocation5 + $0x24] sm:$0xf]
    %v119 = vld [vmem:[#allocation5 + $0x28] sm:$0xf]
    %v120 = vld [vmem:[#allocation5 + $0x2c] sm:$0xf]
    %v121 = vld [vmem:[#allocation5 + $0x30] sm:$0xf]
    %v122 = vld [vmem:[#allocation5 + $0x34] sm:$0xf]
    %v123 = vld [vmem:[#allocation5 + $0x38] sm:$0xf]
    %v124 = vld [vmem:[#allocation5 + $0x3c] sm:$0xf]
    %v125 = vld [vmem:[%s2] sm:$0x1]
    %v127 = vlaneseq
    %v128 = vshrl.u32 %v127, 7
    %v129 = vsub.s32 0, %v128
    %v130 = vrot.slane %v125, %v129
    %v139 = vunpack.c.l.b16 %v102
    %v140 = vunpack.c.l.b16 %v103
    %v141 = vunpack.c.l.b16 %v104
    %v142 = vunpack.c.l.b16 %v105
    %v143 = vunpack.c.l.b16 %v106
    %v144 = vunpack.c.l.b16 %v107
    %v145 = vunpack.c.l.b16 %v108
    %v146 = vpack.c.b16 %v140, %v139
    %v147 = vpack.c.b16 %v142, %v141
    %v148 = vpack.c.b16 %v144, %v143
    %v149 = vpack.c.b16 %v145, %v145
    %v170 = vunpack.c.l.b16 %v109
    %v171 = vunpack.c.l.b16 %v110
    %v172 = vunpack.c.l.b16 %v111
    %v173 = vunpack.c.l.b16 %v112
    %v174 = vunpack.c.l.b16 %v113
    %v175 = vunpack.c.l.b16 %v114
    %v176 = vunpack.c.l.b16 %v115
    %v177 = vunpack.c.l.b16 %v116
    %v178 = vunpack.c.l.b16 %v117
    %v179 = vunpack.c.l.b16 %v118
    %v180 = vunpack.c.l.b16 %v119
    %v181 = vunpack.c.l.b16 %v120
    %v182 = vunpack.c.l.b16 %v121
    %v183 = vunpack.c.l.b16 %v122
    %v184 = vunpack.c.l.b16 %v123
    %v185 = vunpack.c.l.b16 %v124
    %v186 = vpack.c.b16 %v171, %v170
    %v187 = vpack.c.b16 %v173, %v172
    %v188 = vpack.c.b16 %v175, %v174
    %v189 = vpack.c.b16 %v177, %v176
    %v190 = vpack.c.b16 %v179, %v178
    %v191 = vpack.c.b16 %v181, %v180
    %v192 = vpack.c.b16 %v183, %v182
    %v193 = vpack.c.b16 %v185, %v184
    %202 = vmatprep.subr.bf16.mxu0 0
    %203 = vmatpush1.bf16.msra.mxu0 %v193
    %204 = vmatprep.subr.bf16.mxu0 0
    %205 = vmatpush1.bf16.msra.mxu0 %v192
    %206 = vmatprep.subr.bf16.mxu0 0
    %207 = vmatpush1.bf16.msra.mxu0 %v191
    %208 = vmatprep.subr.bf16.mxu0 0
    %209 = vmatpush1.bf16.msra.mxu0 %v190
    %210 = vmatprep.subr.bf16.mxu0 0
    %211 = vmatpush1.bf16.msra.mxu0 %v189
    %212 = vmatprep.subr.bf16.mxu0 0
    %213 = vmatpush1.bf16.msra.mxu0 %v188
    %214 = vmatprep.subr.bf16.mxu0 0
    %215 = vmatpush1.bf16.msra.mxu0 %v187
    %216 = vmatprep.subr.bf16.mxu0 0
    %217 = vmatpush1.bf16.msra.mxu0 %v186
    %218 = vmatprep.subr.bf16.mxu0 0
    %219 = vmatpush2.bf16.msra.mxu0 0
    %220 = vmatprep.subr.bf16.mxu0 0
    %221 = vmatpush2.bf16.msra.mxu0 0
    %222 = vmatprep.subr.bf16.mxu0 0
    %223 = vmatpush2.bf16.msra.mxu0 0
    %224 = vmatprep.subr.bf16.mxu0 0
    %225 = vmatpush2.bf16.msra.mxu0 0
    %226 = vmatprep.subr.bf16.mxu0 0
    %227 = vmatpush2.bf16.msra.mxu0 0
    %228 = vmatprep.subr.bf16.mxu0 0
    %229 = vmatpush2.bf16.msra.mxu0 0
    %230 = vmatprep.subr.bf16.mxu0 0
    %231 = vmatpush2.bf16.msra.mxu0 0
    %232 = vmatprep.subr.bf16.mxu0 0
    %233 = vmatpush2.bf16.msra.mxu0 0
    %234 = vmatprep.mubr.bf16.mxu0 0
    %235 = vmatmul.mubr.bf16.gmra.mxu0 %v146
    %v236 = vpop.f32.mrf.mxu0
    %v237 = vadd.f32 %v130, %v236
    %v238 = vpop.f32.mrf.mxu0
    %v239 = vpop.f32.mrf.mxu0
    %v240 = vadd.f32 %v130, %v239
    %v241 = vpop.f32.mrf.mxu0
    %242 = vmatprep.mubr.bf16.mxu0 0
    %243 = vmatmul.mubr.bf16.gmra.mxu0 %v147
    %v244 = vpop.f32.mrf.mxu0
    %v245 = vadd.f32 %v130, %v244
    %v246 = vpop.f32.mrf.mxu0
    %v247 = vpop.f32.mrf.mxu0
    %v248 = vadd.f32 %v130, %v247
    %v249 = vpop.f32.mrf.mxu0
    %250 = vmatprep.mubr.bf16.mxu0 0
    %251 = vmatmul.mubr.bf16.gmra.mxu0 %v148
    %v252 = vpop.f32.mrf.mxu0
    %v253 = vadd.f32 %v130, %v252
    %v254 = vpop.f32.mrf.mxu0
    %v255 = vpop.f32.mrf.mxu0
    %v256 = vadd.f32 %v130, %v255
    %v257 = vpop.f32.mrf.mxu0
    %258 = vmatprep.mubr.bf16.mxu0 0
    %259 = vmatmul.mubr.bf16.gmra.mxu0 %v149
    %v260 = vpop.f32.mrf.mxu0
    %v261 = vadd.f32 %v130, %v260
    %v262 = vpop.f32.mrf.mxu0
    %v263 = vpop.f32.mrf.mxu0
    %v264 = vpop.f32.mrf.mxu0
    %265 = vdwg.mxu0
    %v266 = vpack.c.bf16 %v240, %v237
    %v267 = vpack.c.bf16 %v248, %v245
    %v268 = vpack.c.bf16 %v256, %v253
    %v269 = vpack.c.bf16 %v261, %v261
    %v270 = vld [vmem:[#allocation7] sm:$0xf]
    %v271 = vld [vmem:[#allocation7 + $0x4] sm:$0xf]
    %v272 = vld [vmem:[#allocation7 + $0x8] sm:$0xf]
    %v273 = vld [vmem:[#allocation7 + $0xc] sm:$0xf]
    %v274 = vld [vmem:[#allocation7 + $0x10] sm:$0xf]
    %v275 = vld [vmem:[#allocation7 + $0x14] sm:$0xf]
    %v276 = vld [vmem:[#allocation7 + $0x18] sm:$0xf]
    %v277 = vld [vmem:[#allocation7 + $0x1c] sm:$0xf]
    %v278 = vld [vmem:[#allocation7 + $0x20] sm:$0xf]
    %v279 = vld [vmem:[#allocation7 + $0x24] sm:$0xf]
    %v280 = vld [vmem:[#allocation7 + $0x28] sm:$0xf]
    %v281 = vld [vmem:[#allocation7 + $0x2c] sm:$0xf]
    %v282 = vld [vmem:[#allocation7 + $0x30] sm:$0xf]
    %v283 = vld [vmem:[#allocation7 + $0x34] sm:$0xf]
    %v284 = vld [vmem:[#allocation7 + $0x38] sm:$0xf]
    %v285 = vld [vmem:[#allocation7 + $0x3c] sm:$0xf]
    %v286 = vld [vmem:[%s4] sm:$0x1]
    %v288 = vlaneseq
    %v289 = vshrl.u32 %v288, 7
    %v290 = vsub.s32 0, %v289
    %v291 = vrot.slane %v286, %v290
    %v309 = vunpack.c.l.b16 %v270
    %v310 = vunpack.c.l.b16 %v271
    %v311 = vunpack.c.l.b16 %v272
    %v312 = vunpack.c.l.b16 %v273
    %v313 = vunpack.c.l.b16 %v274
    %v314 = vunpack.c.l.b16 %v275
    %v315 = vunpack.c.l.b16 %v276
    %v316 = vunpack.c.l.b16 %v277
    %v317 = vunpack.c.l.b16 %v278
    %v318 = vunpack.c.l.b16 %v279
    %v319 = vunpack.c.l.b16 %v280
    %v320 = vunpack.c.l.b16 %v281
    %v321 = vunpack.c.l.b16 %v282
    %v322 = vunpack.c.l.b16 %v283
    %v323 = vunpack.c.l.b16 %v284
    %v324 = vunpack.c.l.b16 %v285
    %v325 = vpack.c.b16 %v310, %v309
    %v326 = vpack.c.b16 %v312, %v311
    %v327 = vpack.c.b16 %v314, %v313
    %v328 = vpack.c.b16 %v316, %v315
    %v329 = vpack.c.b16 %v318, %v317
    %v330 = vpack.c.b16 %v320, %v319
    %v331 = vpack.c.b16 %v322, %v321
    %v332 = vpack.c.b16 %v324, %v323
    %341 = vmatprep.subr.bf16.mxu0 0
    %342 = vmatpush1.bf16.msra.mxu0 %v332
    %343 = vmatprep.subr.bf16.mxu0 0
    %344 = vmatpush1.bf16.msra.mxu0 %v331
    %345 = vmatprep.subr.bf16.mxu0 0
    %346 = vmatpush1.bf16.msra.mxu0 %v330
    %347 = vmatprep.subr.bf16.mxu0 0
    %348 = vmatpush1.bf16.msra.mxu0 %v329
    %349 = vmatprep.subr.bf16.mxu0 0
    %350 = vmatpush1.bf16.msra.mxu0 %v328
    %351 = vmatprep.subr.bf16.mxu0 0
    %352 = vmatpush1.bf16.msra.mxu0 %v327
    %353 = vmatprep.subr.bf16.mxu0 0
    %354 = vmatpush1.bf16.msra.mxu0 %v326
    %355 = vmatprep.subr.bf16.mxu0 0
    %356 = vmatpush1.bf16.msra.mxu0 %v325
    %357 = vmatprep.subr.bf16.mxu0 0
    %358 = vmatpush2.bf16.msra.mxu0 0
    %359 = vmatprep.subr.bf16.mxu0 0
    %360 = vmatpush2.bf16.msra.mxu0 0
    %361 = vmatprep.subr.bf16.mxu0 0
    %362 = vmatpush2.bf16.msra.mxu0 0
    %363 = vmatprep.subr.bf16.mxu0 0
    %364 = vmatpush2.bf16.msra.mxu0 0
    %365 = vmatprep.subr.bf16.mxu0 0
    %366 = vmatpush2.bf16.msra.mxu0 0
    %367 = vmatprep.subr.bf16.mxu0 0
    %368 = vmatpush2.bf16.msra.mxu0 0
    %369 = vmatprep.subr.bf16.mxu0 0
    %370 = vmatpush2.bf16.msra.mxu0 0
    %371 = vmatprep.subr.bf16.mxu0 0
    %372 = vmatpush2.bf16.msra.mxu0 0
    %373 = vmatprep.mubr.bf16.mxu0 0
    %374 = vmatmul.mubr.bf16.gmra.mxu0 %v266
    %v375 = vpop.f32.mrf.mxu0
    %v376 = vadd.f32 %v291, %v375
    %v377 = vpop.f32.mrf.mxu0
    %v378 = vpop.f32.mrf.mxu0
    %v379 = vadd.f32 %v291, %v378
    %v380 = vpop.f32.mrf.mxu0
    %381 = vmatprep.mubr.bf16.mxu0 0
    %382 = vmatmul.mubr.bf16.gmra.mxu0 %v267
    %v383 = vpop.f32.mrf.mxu0
    %v384 = vadd.f32 %v291, %v383
    %v385 = vpop.f32.mrf.mxu0
    %v386 = vpop.f32.mrf.mxu0
    %v387 = vadd.f32 %v291, %v386
    %v388 = vpop.f32.mrf.mxu0
    %389 = vmatprep.mubr.bf16.mxu0 0
    %390 = vmatmul.mubr.bf16.gmra.mxu0 %v268
    %v391 = vpop.f32.mrf.mxu0
    %v392 = vadd.f32 %v291, %v391
    %v393 = vpop.f32.mrf.mxu0
    %v394 = vpop.f32.mrf.mxu0
    %v395 = vadd.f32 %v291, %v394
    %v396 = vpop.f32.mrf.mxu0
    %397 = vmatprep.mubr.bf16.mxu0 0
    %398 = vmatmul.mubr.bf16.gmra.mxu0 %v269
    %v399 = vpop.f32.mrf.mxu0
    %v400 = vadd.f32 %v291, %v399
    %v401 = vpop.f32.mrf.mxu0
    %v402 = vpop.f32.mrf.mxu0
    %v403 = vpop.f32.mrf.mxu0
    %404 = vdwg.mxu0
    %v405 = vmax.f32 %v376, 0.0
    %v406 = vmax.f32 %v379, 0.0
    %v407 = vmax.f32 %v384, 0.0
    %v408 = vmax.f32 %v387, 0.0
    %v409 = vmax.f32 %v392, 0.0
    %v410 = vmax.f32 %v395, 0.0
    %v411 = vmax.f32 %v400, 0.0
    %v412 = vpack.c.bf16 %v406, %v405
    %v413 = vpack.c.bf16 %v408, %v407
    %v414 = vpack.c.bf16 %v410, %v409
    %v415 = vpack.c.bf16 %v411, %v411
    %v416 = vld [vmem:[#allocation8] sm:$0xf]
    %v417 = vld [vmem:[#allocation8 + $0x4] sm:$0xf]
    %v418 = vld [vmem:[#allocation8 + $0x8] sm:$0xf]
    %v419 = vld [vmem:[#allocation8 + $0xc] sm:$0xf]
    %v420 = vld [vmem:[#allocation8 + $0x10] sm:$0xf]
    %v421 = vld [vmem:[#allocation8 + $0x14] sm:$0xf]
    %v422 = vld [vmem:[#allocation8 + $0x18] sm:$0xf]
    %v423 = vld [vmem:[#allocation8 + $0x1c] sm:$0xf]
    %v424 = vld [vmem:[#allocation8 + $0x20] sm:$0xf]
    %v425 = vld [vmem:[#allocation8 + $0x24] sm:$0xf]
    %v426 = vld [vmem:[#allocation8 + $0x28] sm:$0xf]
    %v427 = vld [vmem:[#allocation8 + $0x2c] sm:$0xf]
    %v428 = vld [vmem:[#allocation8 + $0x30] sm:$0xf]
    %v429 = vld [vmem:[#allocation8 + $0x34] sm:$0xf]
    %v430 = vld [vmem:[#allocation8 + $0x38] sm:$0xf]
    %v431 = vld [vmem:[#allocation8 + $0x3c] sm:$0xf]
    %v432 = vld [vmem:[%s6] sm:$0x1]
    %v434 = vlaneseq
    %v435 = vshrl.u32 %v434, 7
    %v436 = vsub.s32 0, %v435
    %v437 = vrot.slane %v432, %v436
    %v455 = vunpack.c.l.b16 %v416
    %v456 = vunpack.c.l.b16 %v417
    %v457 = vunpack.c.l.b16 %v418
    %v458 = vunpack.c.l.b16 %v419
    %v459 = vunpack.c.l.b16 %v420
    %v460 = vunpack.c.l.b16 %v421
    %v461 = vunpack.c.l.b16 %v422
    %v462 = vunpack.c.l.b16 %v423
    %v463 = vunpack.c.l.b16 %v424
    %v464 = vunpack.c.l.b16 %v425
    %v465 = vunpack.c.l.b16 %v426
    %v466 = vunpack.c.l.b16 %v427
    %v467 = vunpack.c.l.b16 %v428
    %v468 = vunpack.c.l.b16 %v429
    %v469 = vunpack.c.l.b16 %v430
    %v470 = vunpack.c.l.b16 %v431
    %v471 = vpack.c.b16 %v456, %v455
    %v472 = vpack.c.b16 %v458, %v457
    %v473 = vpack.c.b16 %v460, %v459
    %v474 = vpack.c.b16 %v462, %v461
    %v475 = vpack.c.b16 %v464, %v463
    %v476 = vpack.c.b16 %v466, %v465
    %v477 = vpack.c.b16 %v468, %v467
    %v478 = vpack.c.b16 %v470, %v469
    %487 = vmatprep.subr.bf16.mxu0 0
    %488 = vmatpush1.bf16.msra.mxu0 %v478
    %489 = vmatprep.subr.bf16.mxu0 0
    %490 = vmatpush1.bf16.msra.mxu0 %v477
    %491 = vmatprep.subr.bf16.mxu0 0
    %492 = vmatpush1.bf16.msra.mxu0 %v476
    %493 = vmatprep.subr.bf16.mxu0 0
    %494 = vmatpush1.bf16.msra.mxu0 %v475
    %495 = vmatprep.subr.bf16.mxu0 0
    %496 = vmatpush1.bf16.msra.mxu0 %v474
    %497 = vmatprep.subr.bf16.mxu0 0
    %498 = vmatpush1.bf16.msra.mxu0 %v473
    %499 = vmatprep.subr.bf16.mxu0 0
    %500 = vmatpush1.bf16.msra.mxu0 %v472
    %501 = vmatprep.subr.bf16.mxu0 0
    %502 = vmatpush1.bf16.msra.mxu0 %v471
    %503 = vmatprep.subr.bf16.mxu0 0
    %504 = vmatpush2.bf16.msra.mxu0 0
    %505 = vmatprep.subr.bf16.mxu0 0
    %506 = vmatpush2.bf16.msra.mxu0 0
    %507 = vmatprep.subr.bf16.mxu0 0
    %508 = vmatpush2.bf16.msra.mxu0 0
    %509 = vmatprep.subr.bf16.mxu0 0
    %510 = vmatpush2.bf16.msra.mxu0 0
    %511 = vmatprep.subr.bf16.mxu0 0
    %512 = vmatpush2.bf16.msra.mxu0 0
    %513 = vmatprep.subr.bf16.mxu0 0
    %514 = vmatpush2.bf16.msra.mxu0 0
    %515 = vmatprep.subr.bf16.mxu0 0
    %516 = vmatpush2.bf16.msra.mxu0 0
    %517 = vmatprep.subr.bf16.mxu0 0
    %518 = vmatpush2.bf16.msra.mxu0 0
    %519 = vmatprep.mubr.bf16.mxu0 0
    %520 = vmatmul.mubr.bf16.gmra.mxu0 %v412
    %v521 = vpop.f32.mrf.mxu0
    %v522 = vadd.f32 %v437, %v521
    %v523 = vpop.f32.mrf.mxu0
    %v524 = vpop.f32.mrf.mxu0
    %v525 = vadd.f32 %v437, %v524
    %v526 = vpop.f32.mrf.mxu0
    %527 = vmatprep.mubr.bf16.mxu0 0
    %528 = vmatmul.mubr.bf16.gmra.mxu0 %v413
    %v529 = vpop.f32.mrf.mxu0
    %v530 = vadd.f32 %v437, %v529
    %v531 = vpop.f32.mrf.mxu0
    %v532 = vpop.f32.mrf.mxu0
    %v533 = vadd.f32 %v437, %v532
    %v534 = vpop.f32.mrf.mxu0
    %535 = vmatprep.mubr.bf16.mxu0 0
    %536 = vmatmul.mubr.bf16.gmra.mxu0 %v414
    %v537 = vpop.f32.mrf.mxu0
    %v538 = vadd.f32 %v437, %v537
    %v539 = vpop.f32.mrf.mxu0
    %v540 = vpop.f32.mrf.mxu0
    %v541 = vadd.f32 %v437, %v540
    %v542 = vpop.f32.mrf.mxu0
    %543 = vmatprep.mubr.bf16.mxu0 0
    %544 = vmatmul.mubr.bf16.gmra.mxu0 %v415
    %v545 = vpop.f32.mrf.mxu0
    %v546 = vadd.f32 %v437, %v545
    %v547 = vpop.f32.mrf.mxu0
    %v548 = vpop.f32.mrf.mxu0
    %v549 = vpop.f32.mrf.mxu0
    %550 = vdwg.mxu0
    %v551 = vmax.f32 %v522, 0.0
    %v552 = vmax.f32 %v525, 0.0
    %v553 = vmax.f32 %v530, 0.0
    %v554 = vmax.f32 %v533, 0.0
    %v555 = vmax.f32 %v538, 0.0
    %v556 = vmax.f32 %v541, 0.0
    %v557 = vmax.f32 %v546, 0.0
    %v558 = vpack.c.bf16 %v552, %v551
    %v559 = vpack.c.bf16 %v554, %v553
    %v560 = vpack.c.bf16 %v556, %v555
    %v561 = vpack.c.bf16 %v557, %v557
    %v562 = vld [vmem:[#allocation10] sm:$0xf]
    %v563 = vld [vmem:[#allocation10 + $0x4] sm:$0xf]
    %v564 = vld [vmem:[#allocation10 + $0x8] sm:$0xf]
    %v565 = vld [vmem:[#allocation10 + $0xc] sm:$0xf]
    %v566 = vld [vmem:[#allocation10 + $0x10] sm:$0xf]
    %v567 = vld [vmem:[#allocation10 + $0x14] sm:$0xf]
    %v568 = vld [vmem:[#allocation10 + $0x18] sm:$0xf]
    %v569 = vld [vmem:[#allocation10 + $0x1c] sm:$0xf]
    %v570 = vld [vmem:[#allocation10 + $0x20] sm:$0xf]
    %v571 = vld [vmem:[#allocation10 + $0x24] sm:$0xf]
    %v572 = vld [vmem:[#allocation10 + $0x28] sm:$0xf]
    %v573 = vld [vmem:[#allocation10 + $0x2c] sm:$0xf]
    %v574 = vld [vmem:[#allocation10 + $0x30] sm:$0xf]
    %v575 = vld [vmem:[#allocation10 + $0x34] sm:$0xf]
    %v576 = vld [vmem:[#allocation10 + $0x38] sm:$0xf]
    %v577 = vld [vmem:[#allocation10 + $0x3c] sm:$0xf]
    %v578 = vld [vmem:[%s8] sm:$0x1]
    %v580 = vlaneseq
    %v581 = vshrl.u32 %v580, 7
    %v582 = vsub.s32 0, %v581
    %v583 = vrot.slane %v578, %v582
    %v601 = vunpack.c.l.b16 %v562
    %v602 = vunpack.c.l.b16 %v563
    %v603 = vunpack.c.l.b16 %v564
    %v604 = vunpack.c.l.b16 %v565
    %v605 = vunpack.c.l.b16 %v566
    %v606 = vunpack.c.l.b16 %v567
    %v607 = vunpack.c.l.b16 %v568
    %v608 = vunpack.c.l.b16 %v569
    %v609 = vunpack.c.l.b16 %v570
    %v610 = vunpack.c.l.b16 %v571
    %v611 = vunpack.c.l.b16 %v572
    %v612 = vunpack.c.l.b16 %v573
    %v613 = vunpack.c.l.b16 %v574
    %v614 = vunpack.c.l.b16 %v575
    %v615 = vunpack.c.l.b16 %v576
    %v616 = vunpack.c.l.b16 %v577
    %v617 = vpack.c.b16 %v602, %v601
    %v618 = vpack.c.b16 %v604, %v603
    %v619 = vpack.c.b16 %v606, %v605
    %v620 = vpack.c.b16 %v608, %v607
    %v621 = vpack.c.b16 %v610, %v609
    %v622 = vpack.c.b16 %v612, %v611
    %v623 = vpack.c.b16 %v614, %v613
    %v624 = vpack.c.b16 %v616, %v615
    %633 = vmatprep.subr.bf16.mxu0 0
    %634 = vmatpush1.bf16.msra.mxu0 %v624
    %635 = vmatprep.subr.bf16.mxu0 0
    %636 = vmatpush1.bf16.msra.mxu0 %v623
    %637 = vmatprep.subr.bf16.mxu0 0
    %638 = vmatpush1.bf16.msra.mxu0 %v622
    %639 = vmatprep.subr.bf16.mxu0 0
    %640 = vmatpush1.bf16.msra.mxu0 %v621
    %641 = vmatprep.subr.bf16.mxu0 0
    %642 = vmatpush1.bf16.msra.mxu0 %v620
    %643 = vmatprep.subr.bf16.mxu0 0
    %644 = vmatpush1.bf16.msra.mxu0 %v619
    %645 = vmatprep.subr.bf16.mxu0 0
    %646 = vmatpush1.bf16.msra.mxu0 %v618
    %647 = vmatprep.subr.bf16.mxu0 0
    %648 = vmatpush1.bf16.msra.mxu0 %v617
    %649 = vmatprep.subr.bf16.mxu0 0
    %650 = vmatpush2.bf16.msra.mxu0 0
    %651 = vmatprep.subr.bf16.mxu0 0
    %652 = vmatpush2.bf16.msra.mxu0 0
    %653 = vmatprep.subr.bf16.mxu0 0
    %654 = vmatpush2.bf16.msra.mxu0 0
    %655 = vmatprep.subr.bf16.mxu0 0
    %656 = vmatpush2.bf16.msra.mxu0 0
    %657 = vmatprep.subr.bf16.mxu0 0
    %658 = vmatpush2.bf16.msra.mxu0 0
    %659 = vmatprep.subr.bf16.mxu0 0
    %660 = vmatpush2.bf16.msra.mxu0 0
    %661 = vmatprep.subr.bf16.mxu0 0
    %662 = vmatpush2.bf16.msra.mxu0 0
    %663 = vmatprep.subr.bf16.mxu0 0
    %664 = vmatpush2.bf16.msra.mxu0 0
    %665 = vmatprep.mubr.bf16.mxu0 0
    %666 = vmatmul.mubr.bf16.gmra.mxu0 %v558
    %v667 = vpop.f32.mrf.mxu0
    %v668 = vadd.f32 %v583, %v667
    %v669 = vpop.f32.mrf.mxu0
    %v670 = vpop.f32.mrf.mxu0
    %v671 = vadd.f32 %v583, %v670
    %v672 = vpop.f32.mrf.mxu0
    %673 = vmatprep.mubr.bf16.mxu0 0
    %674 = vmatmul.mubr.bf16.gmra.mxu0 %v559
    %v675 = vpop.f32.mrf.mxu0
    %v676 = vadd.f32 %v583, %v675
    %v677 = vpop.f32.mrf.mxu0
    %v678 = vpop.f32.mrf.mxu0
    %v679 = vadd.f32 %v583, %v678
    %v680 = vpop.f32.mrf.mxu0
    %681 = vmatprep.mubr.bf16.mxu0 0
    %682 = vmatmul.mubr.bf16.gmra.mxu0 %v560
    %v683 = vpop.f32.mrf.mxu0
    %v684 = vadd.f32 %v583, %v683
    %v685 = vpop.f32.mrf.mxu0
    %v686 = vpop.f32.mrf.mxu0
    %v687 = vadd.f32 %v583, %v686
    %v688 = vpop.f32.mrf.mxu0
    %689 = vmatprep.mubr.bf16.mxu0 0
    %690 = vmatmul.mubr.bf16.gmra.mxu0 %v561
    %v691 = vpop.f32.mrf.mxu0
    %v692 = vadd.f32 %v583, %v691
    %v693 = vpop.f32.mrf.mxu0
    %v694 = vpop.f32.mrf.mxu0
    %v695 = vpop.f32.mrf.mxu0
    %696 = vdwg.mxu0
    %697 = vst [vmem:[#allocation11] sm:$0xff] %v668
    %698 = vst [vmem:[#allocation11 + $0x8] sm:$0xff] %v671
    %699 = vst [vmem:[#allocation11 + $0x10] sm:$0xff] %v676
    %700 = vst [vmem:[#allocation11 + $0x18] sm:$0xff] %v679
    %701 = vst [vmem:[#allocation11 + $0x20] sm:$0xff] %v684
    %702 = vst [vmem:[#allocation11 + $0x28] sm:$0xff] %v687
    %703 = vst [vmem:[#allocation11 + $0x30] sm:$0xff] %v692
    // Predicated region
    $region58: #{tpu_custom_call.1} parent=1 // pred_check
      _
    $region59: #{tpu_custom_call.1} parent=1 // pred_check_branch
      %705 = sbr.rel (0) target = $region61
    $region60: #{tpu_custom_call.1} parent=1 // pred_region
      %s707 = ssub.s32 896, 896
      %708 = vsyncadd [#allocation4], %s707
      %s709 = sshll.u32 [#allocation11], 4
      %s710 = int_to_ptr.vmem [resolvable:$true] %s709
      %715 = dma.vmem_to_hbm [thread:$0]  %s710, 896, %s9, [#allocation4], 128, 128, 8
    $region61: #{tpu_custom_call.1} parent=1 // pred_fallthru
      _
    // Predicated region
    $region62: #{tpu_custom_call.1} parent=1 // pred_check
      _
    $region63: #{tpu_custom_call.1} parent=1 // pred_check_branch
      %717 = sbr.rel (0) target = $region65
    $region64: #{tpu_custom_call.1} parent=1 // pred_region
      %718 = dma.done [#allocation4], 896
    $region65: #{tpu_custom_call.1} parent=1 // pred_fallthru
      _
    %719 = vsyncpa [#allocation3], 1
    %720 = vsyncpa [#allocation6], 1
    %721 = vsyncpa [#allocation9], 1
    %722 = vsyncpa [#allocation4], 1

</llo_original>
